<compile_context>
chip_gen: v6e
topology: v6e:2x2x1
jax: 0.10.0
libtpu: 0.0.40
codegen_flags: <defaults>
</compile_context>

<pallas_src>
import functools

import jax
import jax.numpy as jnp
from jax.experimental import pallas as pl
from jax.experimental.pallas import tpu as pltpu


def _transition_kernel(x_ref, scale_ref, shift_ref, wt_ref, o_ref, *, dot_dtype):
    # x_ref: (C_in, T) spatial-on-lanes; scale/shift: (C_in, 1) f32;
    # wt: (C_out, C_in) already in dot dtype; o: (C_out, T).
    x = x_ref[...]
    y = x.astype(jnp.float32) * scale_ref[...] + shift_ref[...]   # fused BatchNorm (eval mode)
    y = jnp.maximum(y, 0.0)                                        # ReLU
    if dot_dtype is not None:                                      # bf16 MXU path (f32 accumulate)
        y = y.astype(dot_dtype)
    o_ref[...] = jnp.dot(
        wt_ref[...], y, preferred_element_type=jnp.float32
    ).astype(o_ref.dtype)                                          # 1x1 ConvTranspose == channel matmul


def _vmem_budget_bytes():
    """Generation-aware working-set budget: v7x has 64 MiB VMEM (shared with compiler
    scratch), v5e/v6e have 128 MiB. Unknown -> assume the smaller chip (safe everywhere)."""
    try:
        cap = pltpu.get_tpu_info().vmem_capacity_bytes
    except Exception:  # pragma: no cover - info query unavailable
        cap = 64 << 20
    if cap >= (100 << 20):      # v5e / v6e (128 MiB physical)
        return 56 << 20
    return 40 << 20             # v7x (64 MiB physical)


def _pick_tile(hw, n_batch, c_in, c_out, x_bytes, out_bytes, dot_bytes, budget_bytes):
    """Pick the spatial tile T (multiple of 128 lanes) and return (T, need_bytes).

    Per-lane VMEM footprint (per spatial column):
      * double-buffered input tile  : 2 * x_bytes  * c_in
      * double-buffered output tile : 2 * out_bytes * c_out
      * f32 y = relu(bn(x)) temp    : 4 * c_in
      * f32 matmul accumulator      : 4 * c_out
      * low-precision copy of y     : dot_bytes * c_in   (only when dot dtype != f32)
    Resident constants (scale, shift, weight) are double-buffered by default.
    """
    per_lane = 2 * x_bytes * c_in + 2 * out_bytes * c_out + 4 * c_in + 4 * c_out
    if dot_bytes != 4:
        per_lane += dot_bytes * c_in
    const_bytes = 2 * (2 * 4 * c_in + dot_bytes * c_in * c_out) + (1 << 20)  # + headroom

    t = (budget_bytes - const_bytes) // per_lane

    # Channel-aware cap: tiny channel counts need huge tiles to amortize per-step overhead
    # (~0.35us / ~600 cycles); large channel counts are already DMA-dense per step.
    c_sum = c_in + c_out
    if c_sum <= 32:
        cap = 32768
    elif c_sum <= 128:
        cap = 16384
    elif c_sum <= 512:
        cap = 4096
    else:
        cap = 2048

    t = max(128, min(int(t), cap))
    t = (t // 128) * 128
    hw_pad128 = pl.cdiv(hw, 128) * 128
    t = min(t, hw_pad128)

    # v7x has 2 TensorCores sharding the ("parallel","parallel") grid: when tiles are large,
    # keep at least a few grid steps so neither core sits idle. No effect on v5e/v6e (1 TC).
    while n_batch * pl.cdiv(hw, t) < 4 and t > 512:
        t = max(128, ((t // 2) // 128) * 128)

    need = per_lane * t + const_bytes
    return t, need


def transition_block3(x_nchw, gamma, beta, running_mean, running_var, conv_w,
                      eps=1e-5, dot_dtype=None):
    """x_nchw: (N, C_in, H, W), f32 or bf16.  conv_w: (C_in, C_out, 1, 1) (ConvTranspose2d layout).

    Output dtype follows x_nchw.dtype. dot_dtype=jnp.bfloat16 runs the MXU in bf16 with f32
    accumulation (recommended on all generations when bf16 tolerance is acceptable).
    """
    N, C_in, H, W = x_nchw.shape
    C_out = conv_w.shape[1]
    HW = H * W

    # Fold BN into per-channel scale/shift (inference semantics); channels on the sublane axis.
    g32 = gamma.astype(jnp.float32)
    inv_std = 1.0 / jnp.sqrt(running_var.astype(jnp.float32) + eps)
    scale = (g32 * inv_std).reshape(C_in, 1)
    shift = (beta.astype(jnp.float32)
             - g32 * running_mean.astype(jnp.float32) * inv_std).reshape(C_in, 1)

    # 1x1 ConvTranspose weight (C_in, C_out, 1, 1) -> (C_out, C_in); cast hoisted to the wrapper
    # so a bf16 weight is DMA'd as bf16 (half the resident footprint, no per-step VPU pack).
    w_dtype = jnp.float32 if dot_dtype is None else dot_dtype
    wt = conv_w.reshape(C_in, C_out).T.astype(w_dtype)

    # Keep NCHW: free reshape to (N, C_in, H*W), spatial on the lane axis.
    x3 = x_nchw.reshape(N, C_in, HW)

    out_dtype = x_nchw.dtype
    budget = _vmem_budget_bytes()
    T, need = _pick_tile(
        HW, N, C_in, C_out,
        x_bytes=jnp.dtype(x_nchw.dtype).itemsize,
        out_bytes=jnp.dtype(out_dtype).itemsize,
        dot_bytes=jnp.dtype(w_dtype).itemsize,
        budget_bytes=budget,
    )

    # Ragged last block: no host-side pad/slice. OOB output columns are dropped by Pallas and
    # OOB input lanes only feed those dropped columns (the matmul never mixes spatial columns).
    grid = (N, pl.cdiv(HW, T))

    vmem_limit = int(min(budget, max(16 << 20, need + (2 << 20))))

    out3 = pl.pallas_call(
        functools.partial(_transition_kernel, dot_dtype=dot_dtype),
        out_shape=jax.ShapeDtypeStruct((N, C_out, HW), out_dtype),
        grid_spec=pltpu.PrefetchScalarGridSpec(
            num_scalar_prefetch=0,
            grid=grid,
            in_specs=[
                pl.BlockSpec((None, C_in, T), lambda n, j: (n, 0, j)),   # x tile (pipelined)
                pl.BlockSpec((C_in, 1), lambda n, j: (0, 0)),            # BN scale (resident)
                pl.BlockSpec((C_in, 1), lambda n, j: (0, 0)),            # BN shift (resident)
                pl.BlockSpec((C_out, C_in), lambda n, j: (0, 0)),        # conv weight^T (resident)
            ],
            out_specs=pl.BlockSpec((None, C_out, T), lambda n, j: (n, 0, j)),
        ),
        compiler_params=pltpu.CompilerParams(
            dimension_semantics=("parallel", "parallel"),
            vmem_limit_bytes=vmem_limit,
        ),
    )(x3, scale, shift, wt)

    return out3.reshape(N, C_out, H, W)


def _reference(x_nchw, gamma, beta, running_mean, running_var, conv_w, eps=1e-5):
    inv_std = 1.0 / jnp.sqrt(running_var + eps)
    y = (x_nchw - running_mean[None, :, None, None]) * inv_std[None, :, None, None]
    y = y * gamma[None, :, None, None] + beta[None, :, None, None]
    y = jnp.maximum(y, 0.0)
    w = conv_w.reshape(conv_w.shape[0], conv_w.shape[1])  # (C_in, C_out)
    return jnp.einsum("nihw,io->nohw", y, w)


if __name__ == "__main__":
    key = jax.random.PRNGKey(0)
    k_x, k_g, k_b, k_m, k_v, k_w = jax.random.split(key, 6)

    N, C_in, H, W = 2, 4, 16, 16
    C_out = 8

    x = jax.random.normal(k_x, (N, C_in, H, W), dtype=jnp.float32)
    gamma = jax.random.normal(k_g, (C_in,), dtype=jnp.float32) * 0.1 + 1.0
    beta = jax.random.normal(k_b, (C_in,), dtype=jnp.float32) * 0.1
    running_mean = jax.random.normal(k_m, (C_in,), dtype=jnp.float32) * 0.1
    running_var = jax.random.uniform(k_v, (C_in,), dtype=jnp.float32, minval=0.5, maxval=1.5)
    conv_w = jax.random.normal(k_w, (C_in, C_out, 1, 1), dtype=jnp.float32) * 0.1

    ref = _reference(x, gamma, beta, running_mean, running_var, conv_w)

    # f32 path — tracks the PyTorch module numerics.
    out = transition_block3(x, gamma, beta, running_mean, running_var, conv_w)
    out = jax.block_until_ready(out)
    assert out.shape == (N, C_out, H, W), out.shape
    assert jnp.allclose(out, ref, atol=1e-5, rtol=1e-5), "mismatch vs reference (f32)"

    # bf16-MXU path (all generations) — f32 accumulate, looser tolerance.
    out_bf16 = transition_block3(x, gamma, beta, running_mean, running_var, conv_w,
                                 dot_dtype=jnp.bfloat16)
    out_bf16 = jax.block_until_ready(out_bf16)
    assert jnp.allclose(out_bf16, ref, atol=3e-2, rtol=3e-2), "mismatch vs reference (bf16 dot)"

    # bf16 activations end-to-end (dtype-preserving path): halves HBM bytes of this mem-bound op.
    out_bf16_act = transition_block3(x.astype(jnp.bfloat16), gamma, beta, running_mean,
                                     running_var, conv_w, dot_dtype=jnp.bfloat16)
    out_bf16_act = jax.block_until_ready(out_bf16_act)
    assert out_bf16_act.dtype == jnp.bfloat16
    assert jnp.allclose(out_bf16_act.astype(jnp.float32), ref, atol=5e-2, rtol=5e-2), \
        "mismatch vs reference (bf16 activations)"

    print("KERNEL_OK")
</pallas_src>

<mosaic_0001>
module attributes {stable_mosaic.version = 11 : i64} {
  func.func @_transition_kernel(%arg0: i32, %arg1: i32, %arg2: memref<1x4x256xf32, #tpu.memory_space<vmem>>, %arg3: memref<4x1xf32, #tpu.memory_space<vmem>>, %arg4: memref<4x1xf32, #tpu.memory_space<vmem>>, %arg5: memref<8x4xf32, #tpu.memory_space<vmem>>, %arg6: memref<1x8x256xf32, #tpu.memory_space<vmem>>) attributes {dimension_semantics = [#tpu.dimension_semantics<parallel>, #tpu.dimension_semantics<parallel>], iteration_bounds = array<i64: 2, 1>, scalar_prefetch = 0 : i64, scratch_operands = 0 : i64, tpu.core_type = #tpu.core_type<tc>, window_params = [{transform_indices = @transform_0, window_bounds = array<i64: 1, 4, 256>}, {pipeline_mode = #tpu.pipeline_mode<synchronous>, transform_indices = @transform_1, window_bounds = array<i64: 4, 1>}, {pipeline_mode = #tpu.pipeline_mode<synchronous>, transform_indices = @transform_2, window_bounds = array<i64: 4, 1>}, {pipeline_mode = #tpu.pipeline_mode<synchronous>, transform_indices = @transform_3, window_bounds = array<i64: 8, 4>}, {transform_indices = @transform_4, window_bounds = array<i64: 1, 8, 256>}]} {
    %c0 = arith.constant 0 : index
    %c0_0 = arith.constant 0 : index
    %c0_1 = arith.constant 0 : index
    %0 = vector.load %arg2[%c0, %c0_0, %c0_1] : memref<1x4x256xf32, #tpu.memory_space<vmem>>, vector<1x4x256xf32>
    %1 = vector.shape_cast %0 : vector<1x4x256xf32> to vector<4x256xf32>
    %c0_2 = arith.constant 0 : index
    %c0_3 = arith.constant 0 : index
    %2 = vector.load %arg3[%c0_2, %c0_3] : memref<4x1xf32, #tpu.memory_space<vmem>>, vector<4x1xf32>
    %3 = vector.broadcast %2 : vector<4x1xf32> to vector<4x256xf32>
    %4 = arith.mulf %1, %3 : vector<4x256xf32>
    %c0_4 = arith.constant 0 : index
    %c0_5 = arith.constant 0 : index
    %5 = vector.load %arg4[%c0_4, %c0_5] : memref<4x1xf32, #tpu.memory_space<vmem>>, vector<4x1xf32>
    %6 = vector.broadcast %5 : vector<4x1xf32> to vector<4x256xf32>
    %7 = arith.addf %4, %6 : vector<4x256xf32>
    %cst = arith.constant 0.000000e+00 : f32
    %8 = vector.broadcast %cst : f32 to vector<4x256xf32>
    %9 = arith.maximumf %7, %8 : vector<4x256xf32>
    %c0_6 = arith.constant 0 : index
    %c0_7 = arith.constant 0 : index
    %10 = vector.load %arg5[%c0_6, %c0_7] : memref<8x4xf32, #tpu.memory_space<vmem>>, vector<8x4xf32>
    %cst_8 = arith.constant dense<0.000000e+00> : vector<8x256xf32>
    %11 = tpu.matmul %10, %9, %cst_8 {dimension_numbers = #tpu.dot_dimension_numbers<[1], [0], [0], [1], [0, 0, 1, 1], [], []>} : vector<8x4xf32>, vector<4x256xf32>, vector<8x256xf32> -> vector<8x256xf32>
    %c0_9 = arith.constant 0 : index
    %c0_10 = arith.constant 0 : index
    %c0_11 = arith.constant 0 : index
    %12 = vector.load %arg6[%c0_9, %c0_10, %c0_11] : memref<1x8x256xf32, #tpu.memory_space<vmem>>, vector<1x8x256xf32>
    %13 = vector.shape_cast %12 : vector<1x8x256xf32> to vector<8x256xf32>
    %14 = vector.shape_cast %11 : vector<8x256xf32> to vector<1x8x256xf32>
    tpu.vector_store %arg6[%c0_9, %c0_10, %c0_11], %14 {strides = array<i32>} : memref<1x8x256xf32, #tpu.memory_space<vmem>>, vector<1x8x256xf32>,
    return
  }
  func.func @transform_0(%arg0: i32, %arg1: i32) -> (i32, i32, i32) {
    %c0_i32 = arith.constant 0 : i32
    %c0_i32_0 = arith.constant 0 : i32
    return %arg0, %c0_i32, %arg1 : i32, i32, i32
  }
  func.func @transform_1(%arg0: i32, %arg1: i32) -> (i32, i32) {
    %c0_i32 = arith.constant 0 : i32
    %c0_i32_0 = arith.constant 0 : i32
    %c0_i32_1 = arith.constant 0 : i32
    return %c0_i32, %c0_i32_0 : i32, i32
  }
  func.func @transform_2(%arg0: i32, %arg1: i32) -> (i32, i32) {
    %c0_i32 = arith.constant 0 : i32
    %c0_i32_0 = arith.constant 0 : i32
    %c0_i32_1 = arith.constant 0 : i32
    return %c0_i32, %c0_i32_0 : i32, i32
  }
  func.func @transform_3(%arg0: i32, %arg1: i32) -> (i32, i32) {
    %c0_i32 = arith.constant 0 : i32
    %c0_i32_0 = arith.constant 0 : i32
    %c0_i32_1 = arith.constant 0 : i32
    return %c0_i32, %c0_i32_0 : i32, i32
  }
  func.func @transform_4(%arg0: i32, %arg1: i32) -> (i32, i32, i32) {
    %c0_i32 = arith.constant 0 : i32
    %c0_i32_0 = arith.constant 0 : i32
    return %arg0, %c0_i32, %arg1 : i32, i32, i32
  }
}

</mosaic_0001>

<llo_original>
// kernel: tpu_custom_call.1
$region0: #{tpu_custom_call.1}
  #allocation0 [shape = 'u32[]', space=smem, size = 0x4, offset = 0x4, fixed_abs, tag = 'smem constant byte address 0x4 - core index']
  #allocation1 [shape = 'u32[144,128]{1,0:T(1,128)}', space=vmem, size = 0x12000, scoped, tag = 'internal scratch']
  %s0 = inlined_call_operand.vmem [shape: f32[2,4,256], index: 0, kind: input, shape index: {}]
  %s1 = inlined_call_operand.vmem [shape: f32[4,1], index: 1, kind: input, shape index: {}]
  %s2 = inlined_call_operand.vmem [shape: f32[4,1], index: 2, kind: input, shape index: {}]
  %s3 = inlined_call_operand.vmem [shape: f32[8,4], index: 3, kind: input, shape index: {}]
  %s4 = inlined_call_operand.hbm [shape: f32[2,8,256], index: 4, kind: output, shape index: {}]
  %s5 = sld [smem:[#allocation0]]
  $region49: #{tpu_custom_call.1} parent=0
    _
  %s7 = ssub.s32 1, %s5
  %s8 = scalar_select 0, %s7, %s5
  $region1: #{tpu_custom_call.1} parent=0
    #allocation2 [shape = 'u8[16384]{0}', space=vmem, size = 0x4000, scoped, tag = 'output window, operand 0']
    #allocation3 [shape = 's32[2]{0}', space=sflag, size = 0x8, scoped, tag = 'scoped memory for tpu_custom_call.1']
    %9 = vsyncpa [#allocation3], 0
    %s10 = scalar_lea.sflag [#allocation3], 1
    %11 = vsyncpa %s10, 0
    loop: start=0, step=1, limit=4
    $region2: #{tpu_custom_call.1} parent=1 // loop_pre_header
      _
    $region3: #{tpu_custom_call.1} parent=1 // loop_header
      %s13 = sphi 0, %s17
      %p14 = scmp.ge.s32.totalorder %s13, 4
      %s20 = sphi 0, %s32
      %s21 = sphi 0, %s28
      %s22 = sphi 0, %s20
      %s23 = sphi 0, %s21
      %s24 = sphi 0, %s22
      %s25 = sphi 0, %s23
      %s37 = sphi 0, %s39
      %s40 = sphi 0, %s37
      %s41 = sphi 0, %s40
      %s57 = sphi 0, %s41
      %s61 = sphi 0, %s61
      %s63 = sphi 0, %s61
      %s64 = sphi 0, %s63
      %s78 = sphi 0, %s64
      %s82 = sphi 0, %s82
      %s84 = sphi 0, %s82
      %s85 = sphi 0, %s84
      %s99 = sphi 0, %s85
      %s103 = sphi 0, %s103
      %s105 = sphi 0, %s103
      %s106 = sphi 0, %s105
      %s120 = sphi 0, %s106
      %s128 = sphi 0, %s130
      %s131 = sphi 0, %s128
      %s132 = sphi 0, %s131
      %s148 = sphi 0, %s132
    $region4: #{tpu_custom_call.1} parent=1 // loop_header_branch
      %16 = sbr.rel (%p14) target = $region8
    $region5: #{tpu_custom_call.1} parent=1 // loop_body
      %s18 = ssub.s32 %s13, 1
      %s19 = ssub.s32 %s13, 2
      %s26 = sadd.s32 1, %s21
      %p27 = scmp.ge.s32.totalorder %s26, 1
      %s28 = scalar_select %p27, 0, %s26
      %s29 = sadd.s32 1, %s20
      %s30 = scalar_select %p27, %s29, %s20
      %p31 = scmp.ge.s32.totalorder %s30, 2
      %s32 = scalar_select %p31, 0, %s30
      %s33 = ssub.s32 %s20, %s32
      %s34 = ssub.s32 %s21, %s28
      %s35 = sor.u32 %s33, %s34
      %p36 = scmp.eq.s32.totalorder %s35, 0
      %s38 = sadd.s32 %s37, 1
      %s39 = scalar_select %p36, %s37, %s38
      %p42 = pneg %p36
      %p43 = scmp.eq.s32.totalorder %s13, 1
      %p44 = por %p42, %p43
      %p45 = scmp.ne.s32.totalorder %s37, %s40
      %p46 = scmp.eq.s32.totalorder %s13, 0
      %p47 = por %p45, %p46
      %p48 = scmp.ne.s32.totalorder %s37, %s40
      %p49 = scmp.eq.s32.totalorder %s18, 1
      %p50 = por %p48, %p49
      %p51 = scmp.ne.s32.totalorder %s40, %s41
      %p52 = scmp.eq.s32.totalorder %s18, 0
      %p53 = por %p51, %p52
      %p54 = scmp.ne.s32.totalorder %s40, %s41
      %p55 = scmp.eq.s32.totalorder %s19, 1
      %p56 = por %p54, %p55
      %p58 = scmp.ne.s32.totalorder %s41, %s57
      %p59 = scmp.eq.s32.totalorder %s19, 0
      %p60 = por %p58, %p59
      %s62 = sadd.s32 %s61, 1
      %p65 = scmp.eq.s32.totalorder %s13, 1
      %p66 = scmp.ne.s32.totalorder %s61, %s63
      %p67 = scmp.eq.s32.totalorder %s13, 0
      %p68 = por %p66, %p67
      %p69 = scmp.ne.s32.totalorder %s61, %s63
      %p70 = scmp.eq.s32.totalorder %s18, 1
      %p71 = por %p69, %p70
      %p72 = scmp.ne.s32.totalorder %s63, %s64
      %p73 = scmp.eq.s32.totalorder %s18, 0
      %p74 = por %p72, %p73
      %p75 = scmp.ne.s32.totalorder %s63, %s64
      %p76 = scmp.eq.s32.totalorder %s19, 1
      %p77 = por %p75, %p76
      %p79 = scmp.ne.s32.totalorder %s64, %s78
      %p80 = scmp.eq.s32.totalorder %s19, 0
      %p81 = por %p79, %p80
      %s83 = sadd.s32 %s82, 1
      %p86 = scmp.eq.s32.totalorder %s13, 1
      %p87 = scmp.ne.s32.totalorder %s82, %s84
      %p88 = scmp.eq.s32.totalorder %s13, 0
      %p89 = por %p87, %p88
      %p90 = scmp.ne.s32.totalorder %s82, %s84
      %p91 = scmp.eq.s32.totalorder %s18, 1
      %p92 = por %p90, %p91
      %p93 = scmp.ne.s32.totalorder %s84, %s85
      %p94 = scmp.eq.s32.totalorder %s18, 0
      %p95 = por %p93, %p94
      %p96 = scmp.ne.s32.totalorder %s84, %s85
      %p97 = scmp.eq.s32.totalorder %s19, 1
      %p98 = por %p96, %p97
      %p100 = scmp.ne.s32.totalorder %s85, %s99
      %p101 = scmp.eq.s32.totalorder %s19, 0
      %p102 = por %p100, %p101
      %s104 = sadd.s32 %s103, 1
      %p107 = scmp.eq.s32.totalorder %s13, 1
      %p108 = scmp.ne.s32.totalorder %s103, %s105
      %p109 = scmp.eq.s32.totalorder %s13, 0
      %p110 = por %p108, %p109
      %p111 = scmp.ne.s32.totalorder %s103, %s105
      %p112 = scmp.eq.s32.totalorder %s18, 1
      %p113 = por %p111, %p112
      %p114 = scmp.ne.s32.totalorder %s105, %s106
      %p115 = scmp.eq.s32.totalorder %s18, 0
      %p116 = por %p114, %p115
      %p117 = scmp.ne.s32.totalorder %s105, %s106
      %p118 = scmp.eq.s32.totalorder %s19, 1
      %p119 = por %p117, %p118
      %p121 = scmp.ne.s32.totalorder %s106, %s120
      %p122 = scmp.eq.s32.totalorder %s19, 0
      %p123 = por %p121, %p122
      %s124 = ssub.s32 %s20, %s32
      %s125 = ssub.s32 %s21, %s28
      %s126 = sor.u32 %s124, %s125
      %p127 = scmp.eq.s32.totalorder %s126, 0
      %s129 = sadd.s32 %s128, 1
      %s130 = scalar_select %p127, %s128, %s129
      %p133 = pneg %p127
      %p134 = scmp.eq.s32.totalorder %s13, 1
      %p135 = por %p133, %p134
      %p136 = scmp.ne.s32.totalorder %s128, %s131
      %p137 = scmp.eq.s32.totalorder %s13, 0
      %p138 = por %p136, %p137
      %p139 = scmp.ne.s32.totalorder %s128, %s131
      %p140 = scmp.eq.s32.totalorder %s18, 1
      %p141 = por %p139, %p140
      %p142 = scmp.ne.s32.totalorder %s131, %s132
      %p143 = scmp.eq.s32.totalorder %s18, 0
      %p144 = por %p142, %p143
      %p145 = scmp.ne.s32.totalorder %s131, %s132
      %p146 = scmp.eq.s32.totalorder %s19, 1
      %p147 = por %p145, %p146
      %p149 = scmp.ne.s32.totalorder %s132, %s148
      %p150 = scmp.eq.s32.totalorder %s19, 0
      %p151 = por %p149, %p150
      %p152 = scmp.le.s32.totalorder 1, %s13
      %p153 = scmp.lt.s32.totalorder %s13, 3
      %p154 = pnand %p152, %p153
      %p155 = pneg %p154
      // Predicated region
      $region9: #{tpu_custom_call.1} parent=5 // pred_check
        _
      $region10: #{tpu_custom_call.1} parent=5 // pred_check_branch
        %157 = sbr.rel (%p154) target = $region12
      $region11: #{tpu_custom_call.1} parent=5 // pred_region
        %s158 = ssub.s32 %s13, 1
        // Predicated region
        $region13: #{tpu_custom_call.1} parent=11 // pred_check
          %p159 = pneg %p74
        $region14: #{tpu_custom_call.1} parent=11 // pred_check_branch
          %161 = sbr.rel (%p159) target = $region16
        $region15: #{tpu_custom_call.1} parent=11 // pred_region
          _
        $region16: #{tpu_custom_call.1} parent=11 // pred_fallthru
          _
        // Predicated region
        $region17: #{tpu_custom_call.1} parent=11 // pred_check
          %p162 = pneg %p95
        $region18: #{tpu_custom_call.1} parent=11 // pred_check_branch
          %164 = sbr.rel (%p162) target = $region20
        $region19: #{tpu_custom_call.1} parent=11 // pred_region
          _
        $region20: #{tpu_custom_call.1} parent=11 // pred_fallthru
          _
        // Predicated region
        $region21: #{tpu_custom_call.1} parent=11 // pred_check
          %p165 = pneg %p116
        $region22: #{tpu_custom_call.1} parent=11 // pred_check_branch
          %167 = sbr.rel (%p165) target = $region24
        $region23: #{tpu_custom_call.1} parent=11 // pred_region
          _
        $region24: #{tpu_custom_call.1} parent=11 // pred_fallthru
          _
      $region12: #{tpu_custom_call.1} parent=5 // pred_fallthru
        _
      %p168 = scmp.lt.s32.totalorder %s13, 2
      // Predicated region
      $region25: #{tpu_custom_call.1} parent=5 // pred_check
        %p169 = pneg %p168
      $region26: #{tpu_custom_call.1} parent=5 // pred_check_branch
        %171 = sbr.rel (%p169) target = $region28
      $region27: #{tpu_custom_call.1} parent=5 // pred_region
        // Predicated region
        $region29: #{tpu_custom_call.1} parent=27 // pred_check
          %p172 = pneg %p47
        $region30: #{tpu_custom_call.1} parent=27 // pred_check_branch
          %174 = sbr.rel (%p172) target = $region32
        $region31: #{tpu_custom_call.1} parent=27 // pred_region
          %s175 = smul.u32 2, %s21
          %p176 = scmp.lt.s32.totalorder %s20, 1
          %s177 = scalar_select %p176, %s20, 1
          %p178 = scmp.lt.s32.totalorder %s175, 1
          %s179 = scalar_select %p178, %s175, 1
          %s180 = smul.addr %s177, 2
          %s181 = sadd.s32 %s179, %s180
          %s182 = smul.addr %s181, 4
          %s183 = scalar_lea.vmem %s0, %s182
          %s184 = smul.u32 2, %s21
        $region32: #{tpu_custom_call.1} parent=27 // pred_fallthru
          _
      $region28: #{tpu_custom_call.1} parent=5 // pred_fallthru
        _
      %p185 = scmp.le.s32.totalorder 1, %s13
      %p186 = scmp.lt.s32.totalorder %s13, 3
      %p187 = pnand %p185, %p186
      %p188 = pneg %p187
      // Predicated region
      $region33: #{tpu_custom_call.1} parent=5 // pred_check
        _
      $region34: #{tpu_custom_call.1} parent=5 // pred_check_branch
        %190 = sbr.rel (%p187) target = $region36
      $region35: #{tpu_custom_call.1} parent=5 // pred_region
        %s191 = ssub.s32 %s13, 1
        %s192 = smul.u32 2, %s23
        %p193 = scmp.lt.s32.totalorder %s22, 1
        %s194 = scalar_select %p193, %s22, 1
        %p195 = scmp.lt.s32.totalorder %s192, 1
        %s196 = scalar_select %p195, %s192, 1
        %s197 = smul.addr %s194, 2
        %s198 = sadd.s32 %s196, %s197
        %s199 = smul.addr %s198, 4
        %s200 = scalar_lea.vmem %s0, %s199
        %p201 = pneg %p53
        %p202 = pneg %p50
        %p203 = pneg %p74
        %p204 = pneg %p71
        %p205 = pneg %p95
        %p206 = pneg %p92
        %p207 = pneg %p116
        %p208 = pneg %p113
        %p209 = pneg %p144
        %p210 = pneg %p141
        %s211 = sand.u32 %s131, 1
        %s212 = scalar_lea.sflag [#allocation3], %s211
        %s213 = sand.u32 %s131, 1
        %s214 = smul.addr %s213, 16
        %s215 = scalar_lea.vmem [#allocation2], %s214
        %s216 = smul.u32 2, %s23
        %p217 = scmp.lt.s32.totalorder %s22, 1
        %s218 = scalar_select %p217, %s22, 1
        %p219 = scmp.lt.s32.totalorder %s216, 1
        %s220 = scalar_select %p219, %s216, 1
        %s221 = smul.addr %s218, 2
        %s222 = sadd.s32 %s220, %s221
        %s223 = smul.addr %s222, 4
        %s224 = scalar_lea.vmem %s0, %s223
        %s225 = smul.u32 2, %s23
        %s226 = smul.u32 2, %s23
        %v227 = vld [vmem:[%s224] sm:$0xff]
        %v228 = vld [vmem:[%s1] sm:$0xf]
        %230 = vset.pattern.permute.xlu0 0
        %231 = vperm.xlu0 %230, %v228
        %v232 = vpop.permute.xlu0 %231
        %v234 = vunpack.c.l.s4 839922192
        %v235 = vunpack.c.0.s8 %v234
        %v236 = vlaneseq
        %v237 = vshrl.u32 %v236, 7
        %v238 = vsub.s32 %v235, %v237
        %v239 = vrot.slane %v232, %v238
        %v241 = vmul.f32 %v227, %v239
        %v242 = vld [vmem:[%s2] sm:$0xf]
        %244 = vset.pattern.permute.xlu0 0
        %245 = vperm.xlu0 %244, %v242
        %v246 = vpop.permute.xlu0 %245
        %v248 = vunpack.c.l.s4 839922192
        %v249 = vunpack.c.0.s8 %v248
        %v250 = vlaneseq
        %v251 = vshrl.u32 %v250, 7
        %v252 = vsub.s32 %v249, %v251
        %v253 = vrot.slane %v246, %v252
        %v255 = vadd.f32 %v241, %v253
        %v256 = vmax.f32 %v255, 0.0
        %v257 = vld [vmem:[%s3] sm:$0xff]
        %v259 = vcombine.high %v256, %v256
        %vm260 = vcmask 31744
        %v262 = vsel %vm260, %v257, 0
        %vm264 = vcmask 1043456
        %v265 = vsel %vm264, %v256, 0
        %v267 = vsel %vm264, %v259, 0
        %269 = vmatprep.subr.mxu0 0.0
        %270 = vmatpush1.msra.mxu0 0.0
        %271 = vmatprep.subr.mxu0 0.0
        %272 = vmatpush1.msra.mxu0 0.0
        %273 = vmatprep.subr.mxu0 0.0
        %274 = vmatpush1.msra.mxu0 0.0
        %275 = vmatprep.subr.mxu0 0.0
        %276 = vmatpush1.msra.mxu0 0.0
        %277 = vmatprep.subr.mxu0 0.0
        %278 = vmatpush1.msra.mxu0 0.0
        %279 = vmatprep.subr.mxu0 0.0
        %280 = vmatpush1.msra.mxu0 0.0
        %281 = vmatprep.subr.mxu0 0.0
        %282 = vmatpush1.msra.mxu0 0.0
        %283 = vmatprep.subr.mxu0 0.0
        %284 = vmatpush1.msra.mxu0 0.0
        %285 = vmatprep.subr.mxu0 0.0
        %286 = vmatpush1.msra.mxu0 0.0
        %287 = vmatprep.subr.mxu0 0.0
        %288 = vmatpush1.msra.mxu0 0.0
        %289 = vmatprep.subr.mxu0 0.0
        %290 = vmatpush1.msra.mxu0 0.0
        %291 = vmatprep.subr.mxu0 0.0
        %292 = vmatpush1.msra.mxu0 0.0
        %293 = vmatprep.subr.mxu0 0.0
        %294 = vmatpush1.msra.mxu0 0.0
        %295 = vmatprep.subr.mxu0 0.0
        %296 = vmatpush1.msra.mxu0 0.0
        %297 = vmatprep.subr.mxu0 0.0
        %298 = vmatpush1.msra.mxu0 0.0
        %299 = vmatprep.subr.mxu0 %v267
        %300 = vmatpush1.msra.mxu0 %v265
        %301 = vmatprep.subr.mxu0 0.0
        %302 = vmatpush2.msra.mxu0 0.0
        %303 = vmatprep.subr.mxu0 0.0
        %304 = vmatpush2.msra.mxu0 0.0
        %305 = vmatprep.subr.mxu0 0.0
        %306 = vmatpush2.msra.mxu0 0.0
        %307 = vmatprep.subr.mxu0 0.0
        %308 = vmatpush2.msra.mxu0 0.0
        %309 = vmatprep.subr.mxu0 0.0
        %310 = vmatpush2.msra.mxu0 0.0
        %311 = vmatprep.subr.mxu0 0.0
        %312 = vmatpush2.msra.mxu0 0.0
        %313 = vmatprep.subr.mxu0 0.0
        %314 = vmatpush2.msra.mxu0 0.0
        %315 = vmatprep.subr.mxu0 0.0
        %316 = vmatpush2.msra.mxu0 0.0
        %317 = vmatprep.subr.mxu0 0.0
        %318 = vmatpush2.msra.mxu0 0.0
        %319 = vmatprep.subr.mxu0 0.0
        %320 = vmatpush2.msra.mxu0 0.0
        %321 = vmatprep.subr.mxu0 0.0
        %322 = vmatpush2.msra.mxu0 0.0
        %323 = vmatprep.subr.mxu0 0.0
        %324 = vmatpush2.msra.mxu0 0.0
        %325 = vmatprep.subr.mxu0 0.0
        %326 = vmatpush2.msra.mxu0 0.0
        %327 = vmatprep.subr.mxu0 0.0
        %328 = vmatpush2.msra.mxu0 0.0
        %329 = vmatprep.subr.mxu0 0.0
        %330 = vmatpush2.msra.mxu0 0.0
        %331 = vmatprep.subr.mxu0 0.0
        %332 = vmatpush2.msra.mxu0 0.0
        %333 = vmatprep.mubr.f32.mxu0 0.0
        %334 = vmatmul.mubr.f32.gmra.mxu0 %v262
        %v335 = vpop.f32.mrf.mxu0
        %v336 = vadd.f32 0.0, %v335
        %v337 = vpop.f32.mrf.mxu0
        %v338 = vadd.f32 0.0, %v337
        %339 = vdwg.mxu0
        %340 = vst [vmem:[%s215] sm:$0xff] %v336
        %341 = vst [vmem:[%s215 + $0x8] sm:$0xff] %v338
        %s342 = sand.u32 %s131, 1
        %s343 = scalar_lea.sflag [#allocation3], %s342
        %s344 = sand.u32 %s131, 1
        %s345 = smul.addr %s344, 16
        %s346 = scalar_lea.vmem [#allocation2], %s345
        // Predicated region
        $region37: #{tpu_custom_call.1} parent=35 // pred_check
          %p347 = pneg %p141
        $region38: #{tpu_custom_call.1} parent=35 // pred_check_branch
          %349 = sbr.rel (%p347) target = $region40
        $region39: #{tpu_custom_call.1} parent=35 // pred_region
          %s350 = smul.u32 2, %s23
          %s352 = ssub.s32 256, 256
          %353 = vsyncadd %s343, %s352
          %s354 = smul.addr %s22, 2
          %s355 = sadd.s32 %s350, %s354
          %s356 = smul.addr %s355, 128
          %s357 = scalar_lea.hbm %s4, %s356
          %s359 = sshll.u32 %s346, 4
          %s360 = int_to_ptr.vmem [resolvable:$true] %s359
          %362 = dma.vmem_to_hbm [thread:$0]  %s360, 256, %s357, %s343
        $region40: #{tpu_custom_call.1} parent=35 // pred_fallthru
          _
      $region36: #{tpu_custom_call.1} parent=5 // pred_fallthru
        _
      %p363 = scmp.le.s32.totalorder 2, %s13
      // Predicated region
      $region41: #{tpu_custom_call.1} parent=5 // pred_check
        %p364 = pneg %p363
      $region42: #{tpu_custom_call.1} parent=5 // pred_check_branch
        %366 = sbr.rel (%p364) target = $region44
      $region43: #{tpu_custom_call.1} parent=5 // pred_region
        %s367 = ssub.s32 %s13, 2
        // Predicated region
        $region45: #{tpu_custom_call.1} parent=43 // pred_check
          %p368 = pneg %p147
        $region46: #{tpu_custom_call.1} parent=43 // pred_check_branch
          %370 = sbr.rel (%p368) target = $region48
        $region47: #{tpu_custom_call.1} parent=43 // pred_region
          %s371 = sand.u32 %s132, 1
          %s372 = scalar_lea.sflag [#allocation3], %s371
          %s373 = sand.u32 %s132, 1
          %s374 = smul.addr %s373, 16
          %s375 = scalar_lea.vmem [#allocation2], %s374
          %376 = dma.done %s372, 256
        $region48: #{tpu_custom_call.1} parent=43 // pred_fallthru
          _
      $region44: #{tpu_custom_call.1} parent=5 // pred_fallthru
        _
    $region6: #{tpu_custom_call.1} parent=1 // loop_footer
      %s17 = sadd.s32 1, %s13
    $region7: #{tpu_custom_call.1} parent=1 // loop_footer_branch
      %12 = sbr.rel target = $region3
    $region8: #{tpu_custom_call.1} parent=1 // loop_exit
      _
    %377 = vsyncpa [#allocation3], 1
    %s378 = scalar_lea.sflag [#allocation3], 1
    %379 = vsyncpa %s378, 1

</llo_original>
